<compile_context>
chip_gen: v6e
topology: v6e:2x2x1
jax: 0.10.0
libtpu: 0.0.40
codegen_flags: <defaults>
</compile_context>

<pallas_src>
import jax
import jax.numpy as jnp
from jax.experimental import pallas as pl
from jax.experimental.pallas import tpu as pltpu

IN_FEATURES = 9
OUT_FEATURES = 3
MAX_TILE_M = 1024  # rows of x per grid step (multiple of 8)


def linear_kernel(x_ref, wt_ref, b_ref, o_ref):
    # x_ref: [TM, 9], wt_ref: [9, 3] (resident), b_ref: [1, 3] (resident),
    # o_ref: [TM, 3]
    acc = jnp.dot(x_ref[...], wt_ref[...], preferred_element_type=jnp.float32)
    o_ref[...] = (acc + b_ref[...]).astype(o_ref.dtype)


@jax.jit
def linear_pallas(x, wt, b2):
    """x: [B, 9], wt: [9, 3] (pre-transposed), b2: [1, 3]."""
    B = x.shape[0]
    tm = B if B <= MAX_TILE_M else MAX_TILE_M  # tm == B or a multiple of 8
    grid = (pl.cdiv(B, tm),)
    return pl.pallas_call(
        linear_kernel,
        out_shape=jax.ShapeDtypeStruct((B, OUT_FEATURES), x.dtype),
        grid=grid,
        in_specs=[
            # x: tiled over B.
            pl.BlockSpec((tm, IN_FEATURES), lambda i: (i, 0)),
            # weight / bias: constant index_map -> DMA'd once, VMEM-resident.
            pl.BlockSpec((IN_FEATURES, OUT_FEATURES), lambda i: (0, 0)),
            pl.BlockSpec((1, OUT_FEATURES), lambda i: (0, 0)),
        ],
        out_specs=pl.BlockSpec((tm, OUT_FEATURES), lambda i: (i, 0)),
        compiler_params=pltpu.CompilerParams(
            dimension_semantics=("parallel",)  # shard B-tiles across TCs
        ),
    )(x, wt, b2)


def forward(x, wt, b2):
    """Module A forward: supports any leading batch dims, like nn.Linear."""
    lead = x.shape[:-1]
    out = linear_pallas(x.reshape(-1, IN_FEATURES), wt, b2)
    return out.reshape(*lead, OUT_FEATURES)


def init_params():
    """One-time param setup (PyTorch __init__ analogue).

    The transpose / reshape happen here exactly once, never on the per-call
    forward path.
    """
    weight = jnp.ones((OUT_FEATURES, IN_FEATURES), dtype=jnp.float32)  # [3, 9]
    bias = jnp.ones((OUT_FEATURES,), dtype=jnp.float32)                # [3]
    wt = jnp.asarray(weight.T)                   # [9, 3]
    b2 = bias.reshape(1, OUT_FEATURES)           # [1, 3]
    return weight, bias, wt, b2


if __name__ == "__main__":
    key = jax.random.PRNGKey(0)
    B = 8
    x = jax.random.normal(key, (B, IN_FEATURES), dtype=jnp.float32)

    weight, bias, wt, b2 = init_params()

    out = forward(x, wt, b2)
    jax.block_until_ready(out)

    # Reference check in plain JAX (same math as torch's F.linear).
    ref = x @ weight.T + bias
    assert out.shape == (B, OUT_FEATURES)
    assert jnp.allclose(out, ref, atol=1e-5, rtol=1e-5)

    print("KERNEL_OK")
</pallas_src>

<mosaic_0001>
module attributes {stable_mosaic.version = 11 : i64} {
  func.func @linear_kernel(%arg0: i32, %arg1: memref<8x9xf32, #tpu.memory_space<vmem>>, %arg2: memref<9x3xf32, #tpu.memory_space<vmem>>, %arg3: memref<1x3xf32, #tpu.memory_space<vmem>>, %arg4: memref<8x3xf32, #tpu.memory_space<vmem>>) attributes {dimension_semantics = [#tpu.dimension_semantics<parallel>], iteration_bounds = array<i64: 1>, scalar_prefetch = 0 : i64, scratch_operands = 0 : i64, tpu.core_type = #tpu.core_type<tc>, window_params = [{transform_indices = @transform_0, window_bounds = array<i64: 8, 9>}, {pipeline_mode = #tpu.pipeline_mode<synchronous>, transform_indices = @transform_1, window_bounds = array<i64: 9, 3>}, {pipeline_mode = #tpu.pipeline_mode<synchronous>, transform_indices = @transform_2, window_bounds = array<i64: 1, 3>}, {transform_indices = @transform_3, window_bounds = array<i64: 8, 3>}]} {
    %c0 = arith.constant 0 : index
    %c0_0 = arith.constant 0 : index
    %0 = vector.load %arg1[%c0, %c0_0] : memref<8x9xf32, #tpu.memory_space<vmem>>, vector<8x9xf32>
    %c0_1 = arith.constant 0 : index
    %c0_2 = arith.constant 0 : index
    %1 = vector.load %arg2[%c0_1, %c0_2] : memref<9x3xf32, #tpu.memory_space<vmem>>, vector<9x3xf32>
    %cst = arith.constant dense<0.000000e+00> : vector<8x3xf32>
    %2 = tpu.matmul %0, %1, %cst {dimension_numbers = #tpu.dot_dimension_numbers<[1], [0], [0], [1], [0, 0, 1, 1], [], []>} : vector<8x9xf32>, vector<9x3xf32>, vector<8x3xf32> -> vector<8x3xf32>
    %c0_3 = arith.constant 0 : index
    %c0_4 = arith.constant 0 : index
    %3 = vector.load %arg3[%c0_3, %c0_4] : memref<1x3xf32, #tpu.memory_space<vmem>>, vector<1x3xf32>
    %4 = vector.broadcast %3 : vector<1x3xf32> to vector<8x3xf32>
    %5 = arith.addf %2, %4 : vector<8x3xf32>
    %c0_5 = arith.constant 0 : index
    %c0_6 = arith.constant 0 : index
    %6 = vector.load %arg4[%c0_5, %c0_6] : memref<8x3xf32, #tpu.memory_space<vmem>>, vector<8x3xf32>
    tpu.vector_store %arg4[%c0_5, %c0_6], %5 {strides = array<i32>} : memref<8x3xf32, #tpu.memory_space<vmem>>, vector<8x3xf32>,
    return
  }
  func.func @transform_0(%arg0: i32) -> (i32, i32) {
    %c0_i32 = arith.constant 0 : i32
    %c0_i32_0 = arith.constant 0 : i32
    return %arg0, %c0_i32 : i32, i32
  }
  func.func @transform_1(%arg0: i32) -> (i32, i32) {
    %c0_i32 = arith.constant 0 : i32
    %c0_i32_0 = arith.constant 0 : i32
    %c0_i32_1 = arith.constant 0 : i32
    return %c0_i32, %c0_i32_0 : i32, i32
  }
  func.func @transform_2(%arg0: i32) -> (i32, i32) {
    %c0_i32 = arith.constant 0 : i32
    %c0_i32_0 = arith.constant 0 : i32
    %c0_i32_1 = arith.constant 0 : i32
    return %c0_i32, %c0_i32_0 : i32, i32
  }
  func.func @transform_3(%arg0: i32) -> (i32, i32) {
    %c0_i32 = arith.constant 0 : i32
    %c0_i32_0 = arith.constant 0 : i32
    return %arg0, %c0_i32 : i32, i32
  }
}

</mosaic_0001>

<llo_original>
// kernel: linear_pallas.1
$region0: #{linear_pallas.1}
  #allocation0 [shape = 'u32[]', space=smem, size = 0x4, offset = 0x4, fixed_abs, tag = 'smem constant byte address 0x4 - core index']
  #allocation1 [shape = 'u32[144,128]{1,0:T(1,128)}', space=vmem, size = 0x12000, scoped, tag = 'internal scratch']
  %s0 = inlined_call_operand.vmem [shape: f32[8,9], index: 0, kind: input, shape index: {}]
  %s1 = inlined_call_operand.vmem [shape: f32[9,3], index: 1, kind: input, shape index: {}]
  %s2 = inlined_call_operand.vmem [shape: f32[1,3], index: 2, kind: input, shape index: {}]
  %s3 = inlined_call_operand.vmem [shape: f32[8,3], index: 3, kind: output, shape index: {}]
  %s4 = sld [smem:[#allocation0]]
  $region22: #{linear_pallas.1} parent=0
    _
  %s6 = ssub.s32 1, %s4
  %s7 = scalar_select 0, %s6, %s4
  // Predicated region
  $region2: #{linear_pallas.1} parent=0 // pred_check
    _
  $region3: #{linear_pallas.1} parent=0 // pred_check_branch
    %9 = sbr.rel (0) target = $region5
  $region4: #{linear_pallas.1} parent=0 // pred_region
    _
  $region5: #{linear_pallas.1} parent=0 // pred_fallthru
    _
  // Predicated region
  $region6: #{linear_pallas.1} parent=0 // pred_check
    _
  $region7: #{linear_pallas.1} parent=0 // pred_check_branch
    %11 = sbr.rel (0) target = $region9
  $region8: #{linear_pallas.1} parent=0 // pred_region
    _
  $region9: #{linear_pallas.1} parent=0 // pred_fallthru
    _
  // Predicated region
  $region10: #{linear_pallas.1} parent=0 // pred_check
    _
  $region11: #{linear_pallas.1} parent=0 // pred_check_branch
    %13 = sbr.rel (0) target = $region13
  $region12: #{linear_pallas.1} parent=0 // pred_region
    _
  $region13: #{linear_pallas.1} parent=0 // pred_fallthru
    _
  %v14 = vld [vmem:[%s0] sm:$0xff]
  %v15 = vld [vmem:[%s1] sm:$0xff]
  %v16 = vld [vmem:[%s1 + $0x8] sm:$0x1]
  %v17 = vld [vmem:[%s2] sm:$0x1]
  %v19 = vlaneseq
  %v20 = vshrl.u32 %v19, 7
  %v21 = vsub.s32 0, %v20
  %v22 = vrot.slane %v17, %v21
  %vm24 = vcmask 72704
  %v26 = vsel %vm24, %v14, 0
  %vm28 = vcmask 1040384
  %v30 = vsel %vm28, %v16, 0
  %32 = vmatprep.subr.mxu0 0.0
  %33 = vmatpush1.msra.mxu0 0.0
  %34 = vmatprep.subr.mxu0 0.0
  %35 = vmatpush1.msra.mxu0 0.0
  %36 = vmatprep.subr.mxu0 0.0
  %37 = vmatpush1.msra.mxu0 0.0
  %38 = vmatprep.subr.mxu0 0.0
  %39 = vmatpush1.msra.mxu0 0.0
  %40 = vmatprep.subr.mxu0 0.0
  %41 = vmatpush1.msra.mxu0 0.0
  %42 = vmatprep.subr.mxu0 0.0
  %43 = vmatpush1.msra.mxu0 0.0
  %44 = vmatprep.subr.mxu0 0.0
  %45 = vmatpush1.msra.mxu0 0.0
  %46 = vmatprep.subr.mxu0 0.0
  %47 = vmatpush1.msra.mxu0 0.0
  %48 = vmatprep.subr.mxu0 0.0
  %49 = vmatpush1.msra.mxu0 0.0
  %50 = vmatprep.subr.mxu0 0.0
  %51 = vmatpush1.msra.mxu0 0.0
  %52 = vmatprep.subr.mxu0 0.0
  %53 = vmatpush1.msra.mxu0 0.0
  %54 = vmatprep.subr.mxu0 0.0
  %55 = vmatpush1.msra.mxu0 0.0
  %56 = vmatprep.subr.mxu0 0.0
  %57 = vmatpush1.msra.mxu0 0.0
  %58 = vmatprep.subr.mxu0 0.0
  %59 = vmatpush1.msra.mxu0 0.0
  %60 = vmatprep.subr.mxu0 0.0
  %61 = vmatpush1.msra.mxu0 %v30
  %62 = vmatprep.subr.mxu0 0.0
  %63 = vmatpush1.msra.mxu0 %v15
  %64 = vmatprep.subr.mxu0 0.0
  %65 = vmatpush2.msra.mxu0 0.0
  %66 = vmatprep.subr.mxu0 0.0
  %67 = vmatpush2.msra.mxu0 0.0
  %68 = vmatprep.subr.mxu0 0.0
  %69 = vmatpush2.msra.mxu0 0.0
  %70 = vmatprep.subr.mxu0 0.0
  %71 = vmatpush2.msra.mxu0 0.0
  %72 = vmatprep.subr.mxu0 0.0
  %73 = vmatpush2.msra.mxu0 0.0
  %74 = vmatprep.subr.mxu0 0.0
  %75 = vmatpush2.msra.mxu0 0.0
  %76 = vmatprep.subr.mxu0 0.0
  %77 = vmatpush2.msra.mxu0 0.0
  %78 = vmatprep.subr.mxu0 0.0
  %79 = vmatpush2.msra.mxu0 0.0
  %80 = vmatprep.subr.mxu0 0.0
  %81 = vmatpush2.msra.mxu0 0.0
  %82 = vmatprep.subr.mxu0 0.0
  %83 = vmatpush2.msra.mxu0 0.0
  %84 = vmatprep.subr.mxu0 0.0
  %85 = vmatpush2.msra.mxu0 0.0
  %86 = vmatprep.subr.mxu0 0.0
  %87 = vmatpush2.msra.mxu0 0.0
  %88 = vmatprep.subr.mxu0 0.0
  %89 = vmatpush2.msra.mxu0 0.0
  %90 = vmatprep.subr.mxu0 0.0
  %91 = vmatpush2.msra.mxu0 0.0
  %92 = vmatprep.subr.mxu0 0.0
  %93 = vmatpush2.msra.mxu0 0.0
  %94 = vmatprep.subr.mxu0 0.0
  %95 = vmatpush2.msra.mxu0 0.0
  %96 = vmatprep.mubr.f32.mxu0 0.0
  %97 = vmatmul.mubr.f32.gmra.mxu0 %v26
  %v98 = vpop.f32.mrf.mxu0
  %v99 = vadd.f32 %v22, %v98
  %v100 = vpop.f32.mrf.mxu0
  %101 = vdwg.mxu0
  %vm102 = vcmask 23552
  %103 = vst.msk [vmem:[%s3] sm:$0xff] %vm102, %v99
  // Predicated region
  $region14: #{linear_pallas.1} parent=0 // pred_check
    _
  $region15: #{linear_pallas.1} parent=0 // pred_check_branch
    %105 = sbr.rel (0) target = $region17
  $region16: #{linear_pallas.1} parent=0 // pred_region
    _
  $region17: #{linear_pallas.1} parent=0 // pred_fallthru
    _
  // Predicated region
  $region18: #{linear_pallas.1} parent=0 // pred_check
    _
  $region19: #{linear_pallas.1} parent=0 // pred_check_branch
    %107 = sbr.rel (0) target = $region21
  $region20: #{linear_pallas.1} parent=0 // pred_region
    _
  $region21: #{linear_pallas.1} parent=0 // pred_fallthru
    _

</llo_original>
